<compile_context>
chip_gen: v6e
topology: v6e:2x2x1
jax: 0.10.0
libtpu: 0.0.40
codegen_flags: <defaults>
</compile_context>

<pallas_src>
import jax
import jax.numpy as jnp
from jax import lax
from jax.experimental import pallas as pl
from jax.experimental.pallas import tpu as pltpu


def simplenet_kernel(x_ref, w_ref, b_ref, o_ref):
    """x_ref: [B, D_in] (VMEM), w_ref: [1, D_in] (VMEM), b_ref: [1] (SMEM), o_ref: [1, B]."""
    x = x_ref[...]            # [B, D_in] f32
    w = w_ref[...]            # [1, D_in] f32
    # Contract the D_in axis of both operands -> lane-dense [1, B] result (y[0, j] = x[j] . w).
    y = lax.dot_general(w, x, (((1,), (1,)), ((), ())),
                        preferred_element_type=jnp.float32)       # [1, B]
    o_ref[...] = jax.nn.sigmoid(y + b_ref[0])                     # [1, B]


def simplenet_forward(x, w1, b1, w2, b2):
    """x: [B, input_len]; w1: [H, input_len]; b1: [H]; w2: [O, H]; b2: [O] -> [B]."""
    B, d_in = x.shape

    # One-time parameter fold (wrapper glue, outside the kernel):
    #   w_eff = W2[-1] @ W1           -> [D_in]
    #   b_eff = W2[-1] @ b1 + b2[-1]  -> scalar
    w2_last = w2[-1]
    w_eff = (w2_last @ w1).reshape(1, d_in)                       # [1, D_in]
    b_eff = (w2_last @ b1 + b2[-1]).reshape(1)                    # [1] scalar for SMEM

    out_row = pl.pallas_call(
        simplenet_kernel,
        out_shape=jax.ShapeDtypeStruct((1, B), jnp.float32),
        in_specs=[
            pl.BlockSpec(memory_space=pltpu.MemorySpace.VMEM),    # x
            pl.BlockSpec(memory_space=pltpu.MemorySpace.VMEM),    # w_eff row
            pl.BlockSpec(memory_space=pltpu.MemorySpace.SMEM),    # b_eff scalar
        ],
        out_specs=pl.BlockSpec(memory_space=pltpu.MemorySpace.VMEM),
    )(x, w_eff, b_eff)

    return out_row.reshape(B)                                     # PyTorch result shape: [B]
    # TODO(synk): if B is scaled up, tile the batch axis with grid=(cdiv(B,TB),) and a
    # "parallel" dimension_semantics (megacore on v7x); weights map to a constant block.


def _init_linear(key, out_features, in_features):
    """Deterministic init mimicking torch.nn.Linear default (U(-1/sqrt(fan_in), ...))."""
    kw, kb = jax.random.split(key)
    bound = 1.0 / jnp.sqrt(jnp.float32(in_features))
    w = jax.random.uniform(kw, (out_features, in_features), jnp.float32,
                           minval=-bound, maxval=bound)
    b = jax.random.uniform(kb, (out_features,), jnp.float32,
                           minval=-bound, maxval=bound)
    return w, b


if __name__ == "__main__":
    # Small shapes consistent with the module.
    B, input_len, hidden_size, output_size = 8, 16, 32, 4

    key = jax.random.PRNGKey(0)
    kx, k1, k2 = jax.random.split(key, 3)

    x = jax.random.normal(kx, (B, input_len), jnp.float32)
    w1, b1 = _init_linear(k1, hidden_size, input_len)
    w2, b2 = _init_linear(k2, output_size, hidden_size)

    fwd = jax.jit(simplenet_forward)
    out = jax.block_until_ready(fwd(x, w1, b1, w2, b2))

    # Pure-JAX reference with the same semantics as the PyTorch forward (unfused).
    ref = jax.nn.sigmoid((x @ w1.T + b1) @ w2.T + b2)[:, -1]
    assert out.shape == (B,)
    assert jnp.allclose(out, ref, atol=1e-5, rtol=1e-5)

    print("KERNEL_OK")
</pallas_src>

<mosaic_0001>
module attributes {stable_mosaic.version = 11 : i64} {
  func.func @simplenet_kernel(%arg0: memref<8x16xf32, #tpu.memory_space<vmem>>, %arg1: memref<1x16xf32, #tpu.memory_space<vmem>>, %arg2: memref<1xf32, #tpu.memory_space<smem>>, %arg3: memref<1x8xf32, #tpu.memory_space<vmem>>) attributes {dimension_semantics = [], scalar_prefetch = 0 : i64, scratch_operands = 0 : i64, tpu.core_type = #tpu.core_type<tc>} {
    %c0 = arith.constant 0 : index
    %c0_0 = arith.constant 0 : index
    %0 = vector.load %arg0[%c0, %c0_0] : memref<8x16xf32, #tpu.memory_space<vmem>>, vector<8x16xf32>
    %c0_1 = arith.constant 0 : index
    %c0_2 = arith.constant 0 : index
    %1 = vector.load %arg1[%c0_1, %c0_2] : memref<1x16xf32, #tpu.memory_space<vmem>>, vector<1x16xf32>
    %cst = arith.constant dense<0.000000e+00> : vector<1x8xf32>
    %2 = tpu.matmul %1, %0, %cst {dimension_numbers = #tpu.dot_dimension_numbers<[1], [1], [0], [0], [0, 0, 1, 0], [], []>} : vector<1x16xf32>, vector<8x16xf32>, vector<1x8xf32> -> vector<1x8xf32>
    %c0_3 = arith.constant 0 : index
    %3 = memref.load %arg2[%c0_3] : memref<1xf32, #tpu.memory_space<smem>>
    %4 = vector.broadcast %3 : f32 to vector<1x8xf32>
    %5 = arith.addf %2, %4 : vector<1x8xf32>
    %6 = arith.negf %5 : vector<1x8xf32>
    %7 = math.exp %6 : vector<1x8xf32>
    %cst_4 = arith.constant 1.000000e+00 : f32
    %8 = vector.broadcast %cst_4 : f32 to vector<1x8xf32>
    %9 = arith.addf %8, %7 : vector<1x8xf32>
    %10 = arith.divf %8, %9 : vector<1x8xf32>
    %c0_5 = arith.constant 0 : index
    %c0_6 = arith.constant 0 : index
    %11 = vector.load %arg3[%c0_5, %c0_6] : memref<1x8xf32, #tpu.memory_space<vmem>>, vector<1x8xf32>
    tpu.vector_store %arg3[%c0_5, %c0_6], %10 {strides = array<i32>} : memref<1x8xf32, #tpu.memory_space<vmem>>, vector<1x8xf32>,
    return
  }
}

</mosaic_0001>

<llo_original>
// kernel: simplenet_forward.1
$region0: #{simplenet_forward.1}
  #allocation0 [shape = 'u32[]', space=smem, size = 0x4, offset = 0x4, fixed_abs, tag = 'smem constant byte address 0x4 - core index']
  #allocation1 [shape = 'u32[144,128]{1,0:T(1,128)}', space=vmem, size = 0x12000, scoped, tag = 'internal scratch']
  #allocation2 [shape = 'f32[1]{0:T(128)S(6)}', space=smem, size = 0x200, scoped, tag = 'scoped memory for simplenet_forward.1']
  %s0 = inlined_call_operand.vmem [shape: f32[8,16], index: 0, kind: input, shape index: {}]
  %s1 = inlined_call_operand.vmem [shape: f32[1,16], index: 1, kind: input, shape index: {}]
  %s2 = inlined_call_operand.<no memory space> [shape: f32[1], index: 2, kind: input, shape index: {}]
  %s3 = inlined_call_operand.hbm [shape: f32[1,8], index: 3, kind: output, shape index: {}]
  %s4 = sld [smem:[#allocation0]]
  $region22: #{simplenet_forward.1} parent=0
    _
  %s6 = ssub.s32 1, %s4
  %s7 = scalar_select 0, %s6, %s4
  %8 = sst [smem:[#allocation2]] %s2
  $region1: #{simplenet_forward.1} parent=0
    #allocation3 [shape = 'u8[512]{0}', space=vmem, size = 0x400, scoped, tag = 'output window, operand 0, single buffered']
    #allocation4 [shape = 's32[1]{0}', space=sflag, size = 0x4, scoped, tag = 'scoped memory for simplenet_forward.1']
    %9 = vsyncpa [#allocation4], 0
    // Predicated region
    $region2: #{simplenet_forward.1} parent=1 // pred_check
      _
    $region3: #{simplenet_forward.1} parent=1 // pred_check_branch
      %11 = sbr.rel (0) target = $region5
    $region4: #{simplenet_forward.1} parent=1 // pred_region
      _
    $region5: #{simplenet_forward.1} parent=1 // pred_fallthru
      _
    // Predicated region
    $region6: #{simplenet_forward.1} parent=1 // pred_check
      _
    $region7: #{simplenet_forward.1} parent=1 // pred_check_branch
      %13 = sbr.rel (0) target = $region9
    $region8: #{simplenet_forward.1} parent=1 // pred_region
      _
    $region9: #{simplenet_forward.1} parent=1 // pred_fallthru
      _
    // Predicated region
    $region10: #{simplenet_forward.1} parent=1 // pred_check
      _
    $region11: #{simplenet_forward.1} parent=1 // pred_check_branch
      %15 = sbr.rel (0) target = $region13
    $region12: #{simplenet_forward.1} parent=1 // pred_region
      _
    $region13: #{simplenet_forward.1} parent=1 // pred_fallthru
      _
    %v16 = vld [vmem:[%s0] sm:$0xff]
    %v17 = vld [vmem:[%s1] sm:$0x1]
    %s18 = sld [smem:[#allocation2]]
    %v19 = vstv %s18
    %vm20 = vcmask 130048
    %v22 = vsel %vm20, %v17, 0
    %v25 = vsel %vm20, %v16, 0
    %27 = vmatprep.subr.mxu0 0.0
    %28 = vmatpush1.xpose.msra.mxu0 0.0
    %29 = vmatprep.subr.mxu0 0.0
    %30 = vmatpush1.xpose.msra.mxu0 0.0
    %31 = vmatprep.subr.mxu0 0.0
    %32 = vmatpush1.xpose.msra.mxu0 0.0
    %33 = vmatprep.subr.mxu0 0.0
    %34 = vmatpush1.xpose.msra.mxu0 0.0
    %35 = vmatprep.subr.mxu0 0.0
    %36 = vmatpush1.xpose.msra.mxu0 0.0
    %37 = vmatprep.subr.mxu0 0.0
    %38 = vmatpush1.xpose.msra.mxu0 0.0
    %39 = vmatprep.subr.mxu0 0.0
    %40 = vmatpush1.xpose.msra.mxu0 0.0
    %41 = vmatprep.subr.mxu0 0.0
    %42 = vmatpush1.xpose.msra.mxu0 0.0
    %43 = vmatprep.subr.mxu0 0.0
    %44 = vmatpush1.xpose.msra.mxu0 0.0
    %45 = vmatprep.subr.mxu0 0.0
    %46 = vmatpush1.xpose.msra.mxu0 0.0
    %47 = vmatprep.subr.mxu0 0.0
    %48 = vmatpush1.xpose.msra.mxu0 0.0
    %49 = vmatprep.subr.mxu0 0.0
    %50 = vmatpush1.xpose.msra.mxu0 0.0
    %51 = vmatprep.subr.mxu0 0.0
    %52 = vmatpush1.xpose.msra.mxu0 0.0
    %53 = vmatprep.subr.mxu0 0.0
    %54 = vmatpush1.xpose.msra.mxu0 0.0
    %55 = vmatprep.subr.mxu0 0.0
    %56 = vmatpush1.xpose.msra.mxu0 0.0
    %57 = vmatprep.subr.mxu0 0.0
    %58 = vmatpush1.xpose.msra.mxu0 %v25
    %59 = vmatprep.subr.mxu0 0.0
    %60 = vmatpush2.xpose.msra.mxu0 0.0
    %61 = vmatprep.subr.mxu0 0.0
    %62 = vmatpush2.xpose.msra.mxu0 0.0
    %63 = vmatprep.subr.mxu0 0.0
    %64 = vmatpush2.xpose.msra.mxu0 0.0
    %65 = vmatprep.subr.mxu0 0.0
    %66 = vmatpush2.xpose.msra.mxu0 0.0
    %67 = vmatprep.subr.mxu0 0.0
    %68 = vmatpush2.xpose.msra.mxu0 0.0
    %69 = vmatprep.subr.mxu0 0.0
    %70 = vmatpush2.xpose.msra.mxu0 0.0
    %71 = vmatprep.subr.mxu0 0.0
    %72 = vmatpush2.xpose.msra.mxu0 0.0
    %73 = vmatprep.subr.mxu0 0.0
    %74 = vmatpush2.xpose.msra.mxu0 0.0
    %75 = vmatprep.subr.mxu0 0.0
    %76 = vmatpush2.xpose.msra.mxu0 0.0
    %77 = vmatprep.subr.mxu0 0.0
    %78 = vmatpush2.xpose.msra.mxu0 0.0
    %79 = vmatprep.subr.mxu0 0.0
    %80 = vmatpush2.xpose.msra.mxu0 0.0
    %81 = vmatprep.subr.mxu0 0.0
    %82 = vmatpush2.xpose.msra.mxu0 0.0
    %83 = vmatprep.subr.mxu0 0.0
    %84 = vmatpush2.xpose.msra.mxu0 0.0
    %85 = vmatprep.subr.mxu0 0.0
    %86 = vmatpush2.xpose.msra.mxu0 0.0
    %87 = vmatprep.subr.mxu0 0.0
    %88 = vmatpush2.xpose.msra.mxu0 0.0
    %89 = vmatprep.subr.mxu0 0.0
    %90 = vmatpush2.xpose.msra.mxu0 0.0
    %91 = vmatprep.mubr.f32.mxu0 0.0
    %92 = vmatmul.mubr.f32.gmra.mxu0 %v22
    %v93 = vpop.f32.mrf.mxu0
    %v94 = vadd.f32 %v19, %v93
    %v95 = vpop.f32.mrf.mxu0
    %96 = vdwg.mxu0
    %v97 = vxor.u32 %v94, 2147483648
    %v98 = vmul.f32 %v97, 1.442695
    %v99 = vpow.pop %v98
    %v100 = vadd.f32 %v99, 1.0
    %v101 = vrcp.pop %v100
    %v102 = vmul.f32 1.0, %v101
    %vm103 = vcmask 57344
    %104 = vst.msk [vmem:[#allocation3] sm:$0x1] %vm103, %v102
    // Predicated region
    $region14: #{simplenet_forward.1} parent=1 // pred_check
      _
    $region15: #{simplenet_forward.1} parent=1 // pred_check_branch
      %106 = sbr.rel (0) target = $region17
    $region16: #{simplenet_forward.1} parent=1 // pred_region
      %s108 = ssub.s32 16, 16
      %109 = vsyncadd [#allocation4], %s108
      %s111 = sshll.u32 [#allocation3], 4
      %s112 = int_to_ptr.vmem [resolvable:$true] %s111
      %114 = dma.vmem_to_hbm [thread:$0]  %s112, 16, %s3, [#allocation4]
    $region17: #{simplenet_forward.1} parent=1 // pred_fallthru
      _
    // Predicated region
    $region18: #{simplenet_forward.1} parent=1 // pred_check
      _
    $region19: #{simplenet_forward.1} parent=1 // pred_check_branch
      %116 = sbr.rel (0) target = $region21
    $region20: #{simplenet_forward.1} parent=1 // pred_region
      %117 = dma.done [#allocation4], 16
    $region21: #{simplenet_forward.1} parent=1 // pred_fallthru
      _
    %118 = vsyncpa [#allocation4], 1

</llo_original>
